<compile_context>
chip_gen: v6e
topology: v6e:2x2x1
jax: 0.10.0
libtpu: 0.0.40
codegen_flags: <defaults>
</compile_context>

<pallas_src>
import functools

import jax
import jax.numpy as jnp
from jax import lax
from jax.experimental import pallas as pl
from jax.experimental.pallas import tpu as pltpu


def _round_up(n: int, m: int) -> int:
    return ((n + m - 1) // m) * m


def _densefc3_kernel(x_ref, w1_ref, b1_ref, w2_ref, b2_ref, w3_ref, b3_ref,
                     o_ref, *, negative_slope: float, chunk_rows: int):
    """Fused fc1 -> leaky_relu -> fc2 -> leaky_relu -> fc3 on one batch tile.

    The batch tile is processed in `chunk_rows`-row sub-chunks to bound vreg
    live ranges (avoids spilling the (bb, 256) f32 intermediate).
    """
    # Weights / biases are tile-resident; load once per grid step.
    w1 = w1_ref[...]
    b1 = b1_ref[...]
    w2 = w2_ref[...]
    b2 = b2_ref[...]
    w3 = w3_ref[...]
    b3 = b3_ref[...]

    if negative_slope == 0.0:
        def act(v):
            return jnp.maximum(v, 0.0)
    else:
        def act(v):
            return jnp.where(v >= 0, v, negative_slope * v)

    bb = x_ref.shape[0]
    n_chunks = bb // chunk_rows

    def chunk_body(c, carry):
        r = pl.multiple_of(c * chunk_rows, chunk_rows)
        # Cast the x sub-chunk on the VPU (no wrapper-side cast pass over x).
        x = x_ref[pl.ds(r, chunk_rows), :].astype(w1.dtype)

        # fc1 + LeakyReLU (dropout in eval mode == identity)
        h = act(jnp.dot(x, w1, preferred_element_type=jnp.float32) + b1)
        # fc2 + LeakyReLU (dropout in eval mode == identity)
        h = act(jnp.dot(h.astype(w2.dtype), w2,
                        preferred_element_type=jnp.float32) + b2)
        # fc3
        y = jnp.dot(h.astype(w3.dtype), w3,
                    preferred_element_type=jnp.float32) + b3
        o_ref[pl.ds(r, chunk_rows), :] = y.astype(o_ref.dtype)
        return carry

    if n_chunks == 1:
        chunk_body(0, 0)
    else:
        lax.fori_loop(0, n_chunks, chunk_body, 0)


def densefc3_forward(x, params, *, negative_slope: float = 0.0,
                     block_batch: int = 4096, chunk_rows: int = 256,
                     compute_dtype=None, out_dtype=None,
                     vmem_limit_bytes: int = 32 * 1024 * 1024):
    """Fused DenseFC3 forward pass (eval mode) via a Pallas TPU kernel.

    x:      (B, input_size) float32
    params: dict with w1 (in, h0), b1 (1, h0), w2 (h0, h1), b2 (1, h1),
            w3 (h1, out), b3 (1, out)
    compute_dtype: if set (e.g. jnp.bfloat16), the weights are cast host-side
            and the x tile is cast inside the kernel (x stays f32 in HBM).
            Accumulation remains float32; biases stay float32.
    out_dtype: output dtype (defaults to x.dtype).
    """
    w1, b1 = params["w1"], params["b1"]
    w2, b2 = params["w2"], params["b2"]
    w3, b3 = params["w3"], params["b3"]

    B, in_dim = x.shape
    h0 = w1.shape[1]
    h1 = w2.shape[1]
    out_dim = w3.shape[1]
    out_dtype = x.dtype if out_dtype is None else out_dtype

    wdt = compute_dtype if compute_dtype is not None else x.dtype
    w1 = w1.astype(wdt)
    w2 = w2.astype(wdt)
    w3 = w3.astype(wdt)
    b1 = b1.astype(jnp.float32)
    b2 = b2.astype(jnp.float32)
    b3 = b3.astype(jnp.float32)

    # Batch tile: as large as requested, never larger than the 8-rounded
    # batch, always a multiple of 8 (sublane constraint).
    bb = max(8, min(int(block_batch), _round_up(B, 8)))
    bb = _round_up(bb, 8)

    # Sub-chunk size: multiple of 8, divides bb.
    cs = _round_up(max(8, min(int(chunk_rows), bb)), 8)
    while bb % cs != 0:
        cs -= 8

    # No batch padding: cdiv grid; Pallas clips the partial final block's
    # output writeback (rows are independent, so the undefined trailing rows
    # of the last x block never affect written rows).
    grid = (pl.cdiv(B, bb),)

    flops = 2 * B * (in_dim * h0 + h0 * h1 + h1 * out_dim)
    bytes_accessed = int(
        x.size * x.dtype.itemsize
        + w1.size * w1.dtype.itemsize
        + w2.size * w2.dtype.itemsize
        + w3.size * w3.dtype.itemsize
        + (b1.size + b2.size + b3.size) * 4
        + B * out_dim * jnp.dtype(out_dtype).itemsize)

    kernel = functools.partial(_densefc3_kernel,
                               negative_slope=float(negative_slope),
                               chunk_rows=cs)

    def _run(single_buffer_weights: bool):
        if single_buffer_weights:
            def wspec(shape):
                # Loop-invariant operands: single-buffer to halve VMEM
                # residency and drop redundant per-step pipelining work.
                return pl.BlockSpec(shape, lambda i: (0, 0),
                                    pipeline_mode=pl.Buffered(1))
        else:
            def wspec(shape):
                return pl.BlockSpec(shape, lambda i: (0, 0))

        in_specs = [
            pl.BlockSpec((bb, in_dim), lambda i: (i, 0)),   # x tile
            wspec((in_dim, h0)),                            # w1 (resident)
            wspec((1, h0)),                                 # b1
            wspec((h0, h1)),                                # w2
            wspec((1, h1)),                                 # b2
            wspec((h1, out_dim)),                           # w3
            wspec((1, out_dim)),                            # b3
        ]
        return pl.pallas_call(
            kernel,
            out_shape=jax.ShapeDtypeStruct((B, out_dim), out_dtype),
            grid=grid,
            in_specs=in_specs,
            out_specs=pl.BlockSpec((bb, out_dim), lambda i: (i, 0)),
            compiler_params=pltpu.CompilerParams(
                dimension_semantics=("parallel",),
                vmem_limit_bytes=vmem_limit_bytes),
            cost_estimate=pl.CostEstimate(flops=flops, transcendentals=0,
                                          bytes_accessed=bytes_accessed),
        )(x, w1, b1, w2, b2, w3, b3)

    if hasattr(pl, "Buffered"):
        try:
            return _run(True)
        except Exception:
            # pipeline_mode / Buffered(1) unsupported in this JAX build;
            # fall back to default double-buffered weight specs.
            pass
    return _run(False)


def init_densefc3_params(key, input_size, output_size, hidden_size=None,
                         dtype=jnp.float32):
    """Deterministic synthetic parameter init (PyTorch Linear-style uniform)."""
    if hidden_size is None:
        hidden_size = [256, 128]
    dims = [input_size, hidden_size[0], hidden_size[1], output_size]
    params = {}
    for idx in range(3):
        fan_in, fan_out = dims[idx], dims[idx + 1]
        key, kw, kb = jax.random.split(key, 3)
        bound = 1.0 / (fan_in ** 0.5)
        # stored as (in, out) => transposed PyTorch weight
        params[f"w{idx + 1}"] = jax.random.uniform(
            kw, (fan_in, fan_out), dtype, minval=-bound, maxval=bound)
        params[f"b{idx + 1}"] = jax.random.uniform(
            kb, (1, fan_out), dtype, minval=-bound, maxval=bound)
    return params


def densefc3_reference(x, params, negative_slope=0.0):
    """Plain-JAX reference of the PyTorch forward (eval mode)."""
    def lrelu(v):
        return jnp.where(v >= 0, v, negative_slope * v)
    h = lrelu(x @ params["w1"] + params["b1"])
    h = lrelu(h @ params["w2"] + params["b2"])
    return h @ params["w3"] + params["b3"]


if __name__ == "__main__":
    # Small shapes consistent with the module: flat feature vectors.
    input_size = 64
    hidden_size = [256, 128]
    output_size = 32
    negative_slope = 0.0  # module default: LeakyReLU(negative_slope=0.0)

    key = jax.random.PRNGKey(0)
    key, kx1, kx2 = jax.random.split(key, 3)
    params = init_densefc3_params(key, input_size, output_size, hidden_size)

    # 1) Small batch, not a multiple of 8 -> single partial block.
    x_small = jax.random.normal(kx1, (20, input_size), jnp.float32)
    ref_small = densefc3_reference(x_small, params, negative_slope)
    out_small = densefc3_forward(x_small, params, negative_slope=negative_slope)
    out_small = jax.block_until_ready(out_small)
    assert out_small.shape == (20, output_size)
    assert jnp.allclose(out_small, ref_small, atol=1e-4, rtol=1e-4), \
        "f32 small-batch mismatch vs reference"

    # 2) Multi-block grid with a partial final block + in-kernel sub-chunking.
    x_big = jax.random.normal(kx2, (300, input_size), jnp.float32)
    ref_big = densefc3_reference(x_big, params, negative_slope)
    out_big = densefc3_forward(x_big, params, negative_slope=negative_slope,
                               block_batch=128, chunk_rows=64)
    out_big = jax.block_until_ready(out_big)
    assert out_big.shape == (300, output_size)
    assert jnp.allclose(out_big, ref_big, atol=1e-4, rtol=1e-4), \
        "f32 multi-block mismatch vs reference"

    # 3) bf16-operand path (weights bf16 host-side, x cast in-kernel), f32 acc.
    out_bf16 = densefc3_forward(x_big, params, negative_slope=negative_slope,
                                block_batch=128, chunk_rows=64,
                                compute_dtype=jnp.bfloat16)
    out_bf16 = jax.block_until_ready(out_bf16)
    rel_err = jnp.max(jnp.abs(out_bf16 - ref_big)) / (jnp.max(jnp.abs(ref_big)) + 1e-6)
    assert rel_err < 5e-2, f"bf16 path relative error too large: {rel_err}"

    # 4) Nonzero negative_slope exercises the leaky branch.
    out_leaky = densefc3_forward(x_small, params, negative_slope=0.01)
    out_leaky = jax.block_until_ready(out_leaky)
    ref_leaky = densefc3_reference(x_small, params, 0.01)
    assert jnp.allclose(out_leaky, ref_leaky, atol=1e-4, rtol=1e-4), \
        "leaky path mismatch vs reference"

    print("KERNEL_OK")
</pallas_src>

<mosaic_0001>
module attributes {stable_mosaic.version = 11 : i64} {
  func.func @_densefc3_kernel(%arg0: i32, %arg1: memref<24x64xf32, #tpu.memory_space<vmem>>, %arg2: memref<64x256xf32, #tpu.memory_space<vmem>>, %arg3: memref<1x256xf32, #tpu.memory_space<vmem>>, %arg4: memref<256x128xf32, #tpu.memory_space<vmem>>, %arg5: memref<1x128xf32, #tpu.memory_space<vmem>>, %arg6: memref<128x32xf32, #tpu.memory_space<vmem>>, %arg7: memref<1x32xf32, #tpu.memory_space<vmem>>, %arg8: memref<24x32xf32, #tpu.memory_space<vmem>>) attributes {dimension_semantics = [#tpu.dimension_semantics<parallel>], iteration_bounds = array<i64: 1>, scalar_prefetch = 0 : i64, scratch_operands = 0 : i64, tpu.core_type = #tpu.core_type<tc>, window_params = [{transform_indices = @transform_0, window_bounds = array<i64: 24, 64>}, {pipeline_mode = #tpu.pipeline_mode<synchronous>, transform_indices = @transform_1, window_bounds = array<i64: 64, 256>}, {pipeline_mode = #tpu.pipeline_mode<synchronous>, transform_indices = @transform_2, window_bounds = array<i64: 1, 256>}, {pipeline_mode = #tpu.pipeline_mode<synchronous>, transform_indices = @transform_3, window_bounds = array<i64: 256, 128>}, {pipeline_mode = #tpu.pipeline_mode<synchronous>, transform_indices = @transform_4, window_bounds = array<i64: 1, 128>}, {pipeline_mode = #tpu.pipeline_mode<synchronous>, transform_indices = @transform_5, window_bounds = array<i64: 128, 32>}, {pipeline_mode = #tpu.pipeline_mode<synchronous>, transform_indices = @transform_6, window_bounds = array<i64: 1, 32>}, {transform_indices = @transform_7, window_bounds = array<i64: 24, 32>}]} {
    %c0 = arith.constant 0 : index
    %c0_0 = arith.constant 0 : index
    %0 = vector.load %arg2[%c0, %c0_0] : memref<64x256xf32, #tpu.memory_space<vmem>>, vector<64x256xf32>
    %c0_1 = arith.constant 0 : index
    %c0_2 = arith.constant 0 : index
    %1 = vector.load %arg3[%c0_1, %c0_2] : memref<1x256xf32, #tpu.memory_space<vmem>>, vector<1x256xf32>
    %c0_3 = arith.constant 0 : index
    %c0_4 = arith.constant 0 : index
    %2 = vector.load %arg4[%c0_3, %c0_4] : memref<256x128xf32, #tpu.memory_space<vmem>>, vector<256x128xf32>
    %c0_5 = arith.constant 0 : index
    %c0_6 = arith.constant 0 : index
    %3 = vector.load %arg5[%c0_5, %c0_6] : memref<1x128xf32, #tpu.memory_space<vmem>>, vector<1x128xf32>
    %c0_7 = arith.constant 0 : index
    %c0_8 = arith.constant 0 : index
    %4 = vector.load %arg6[%c0_7, %c0_8] : memref<128x32xf32, #tpu.memory_space<vmem>>, vector<128x32xf32>
    %c0_9 = arith.constant 0 : index
    %c0_10 = arith.constant 0 : index
    %5 = vector.load %arg7[%c0_9, %c0_10] : memref<1x32xf32, #tpu.memory_space<vmem>>, vector<1x32xf32>
    %c0_i32 = arith.constant 0 : i32
    %6 = tpu.assume_multiple %c0_i32, 24 : i32
    %7 = arith.index_cast %6 : i32 to index
    %c0_11 = arith.constant 0 : index
    %8 = vector.load %arg1[%7, %c0_11] : memref<24x64xf32, #tpu.memory_space<vmem>>, vector<24x64xf32>
    %cst = arith.constant dense<0.000000e+00> : vector<24x256xf32>
    %9 = tpu.matmul %8, %0, %cst {dimension_numbers = #tpu.dot_dimension_numbers<[1], [0], [0], [1], [0, 0, 1, 1], [], []>} : vector<24x64xf32>, vector<64x256xf32>, vector<24x256xf32> -> vector<24x256xf32>
    %10 = vector.broadcast %1 : vector<1x256xf32> to vector<24x256xf32>
    %11 = arith.addf %9, %10 : vector<24x256xf32>
    %cst_12 = arith.constant 0.000000e+00 : f32
    %12 = vector.broadcast %cst_12 : f32 to vector<24x256xf32>
    %13 = arith.maximumf %11, %12 : vector<24x256xf32>
    %cst_13 = arith.constant dense<0.000000e+00> : vector<24x128xf32>
    %14 = tpu.matmul %13, %2, %cst_13 {dimension_numbers = #tpu.dot_dimension_numbers<[1], [0], [0], [1], [0, 0, 1, 1], [], []>} : vector<24x256xf32>, vector<256x128xf32>, vector<24x128xf32> -> vector<24x128xf32>
    %15 = vector.broadcast %3 : vector<1x128xf32> to vector<24x128xf32>
    %16 = arith.addf %14, %15 : vector<24x128xf32>
    %cst_14 = arith.constant 0.000000e+00 : f32
    %17 = vector.broadcast %cst_14 : f32 to vector<24x128xf32>
    %18 = arith.maximumf %16, %17 : vector<24x128xf32>
    %cst_15 = arith.constant dense<0.000000e+00> : vector<24x32xf32>
    %19 = tpu.matmul %18, %4, %cst_15 {dimension_numbers = #tpu.dot_dimension_numbers<[1], [0], [0], [1], [0, 0, 1, 1], [], []>} : vector<24x128xf32>, vector<128x32xf32>, vector<24x32xf32> -> vector<24x32xf32>
    %20 = vector.broadcast %5 : vector<1x32xf32> to vector<24x32xf32>
    %21 = arith.addf %19, %20 : vector<24x32xf32>
    %22 = arith.index_cast %6 : i32 to index
    %c0_16 = arith.constant 0 : index
    %23 = vector.load %arg8[%22, %c0_16] : memref<24x32xf32, #tpu.memory_space<vmem>>, vector<24x32xf32>
    tpu.vector_store %arg8[%22, %c0_16], %21 {strides = array<i32>} : memref<24x32xf32, #tpu.memory_space<vmem>>, vector<24x32xf32>,
    return
  }
  func.func @transform_0(%arg0: i32) -> (i32, i32) {
    %c0_i32 = arith.constant 0 : i32
    %c0_i32_0 = arith.constant 0 : i32
    return %arg0, %c0_i32 : i32, i32
  }
  func.func @transform_1(%arg0: i32) -> (i32, i32) {
    %c0_i32 = arith.constant 0 : i32
    %c0_i32_0 = arith.constant 0 : i32
    %c0_i32_1 = arith.constant 0 : i32
    return %c0_i32, %c0_i32_0 : i32, i32
  }
  func.func @transform_2(%arg0: i32) -> (i32, i32) {
    %c0_i32 = arith.constant 0 : i32
    %c0_i32_0 = arith.constant 0 : i32
    %c0_i32_1 = arith.constant 0 : i32
    return %c0_i32, %c0_i32_0 : i32, i32
  }
  func.func @transform_3(%arg0: i32) -> (i32, i32) {
    %c0_i32 = arith.constant 0 : i32
    %c0_i32_0 = arith.constant 0 : i32
    %c0_i32_1 = arith.constant 0 : i32
    return %c0_i32, %c0_i32_0 : i32, i32
  }
  func.func @transform_4(%arg0: i32) -> (i32, i32) {
    %c0_i32 = arith.constant 0 : i32
    %c0_i32_0 = arith.constant 0 : i32
    %c0_i32_1 = arith.constant 0 : i32
    return %c0_i32, %c0_i32_0 : i32, i32
  }
  func.func @transform_5(%arg0: i32) -> (i32, i32) {
    %c0_i32 = arith.constant 0 : i32
    %c0_i32_0 = arith.constant 0 : i32
    %c0_i32_1 = arith.constant 0 : i32
    return %c0_i32, %c0_i32_0 : i32, i32
  }
  func.func @transform_6(%arg0: i32) -> (i32, i32) {
    %c0_i32 = arith.constant 0 : i32
    %c0_i32_0 = arith.constant 0 : i32
    %c0_i32_1 = arith.constant 0 : i32
    return %c0_i32, %c0_i32_0 : i32, i32
  }
  func.func @transform_7(%arg0: i32) -> (i32, i32) {
    %c0_i32 = arith.constant 0 : i32
    %c0_i32_0 = arith.constant 0 : i32
    return %arg0, %c0_i32 : i32, i32
  }
}

module attributes {stable_mosaic.version = 11 : i64} {
  func.func @_densefc3_kernel(%arg0: i32, %arg1: memref<24x64xf32, #tpu.memory_space<vmem>>, %arg2: memref<64x256xf32, #tpu.memory_space<vmem>>, %arg3: memref<1x256xf32, #tpu.memory_space<vmem>>, %arg4: memref<256x128xf32, #tpu.memory_space<vmem>>, %arg5: memref<1x128xf32, #tpu.memory_space<vmem>>, %arg6: memref<128x32xf32, #tpu.memory_space<vmem>>, %arg7: memref<1x32xf32, #tpu.memory_space<vmem>>, %arg8: memref<24x32xf32, #tpu.memory_space<vmem>>) attributes {dimension_semantics = [#tpu.dimension_semantics<parallel>], iteration_bounds = array<i64: 1>, scalar_prefetch = 0 : i64, scratch_operands = 0 : i64, tpu.core_type = #tpu.core_type<tc>, window_params = [{transform_indices = @transform_0, window_bounds = array<i64: 24, 64>}, {pipeline_mode = #tpu.pipeline_mode<synchronous>, transform_indices = @transform_1, window_bounds = array<i64: 64, 256>}, {pipeline_mode = #tpu.pipeline_mode<synchronous>, transform_indices = @transform_2, window_bounds = array<i64: 1, 256>}, {pipeline_mode = #tpu.pipeline_mode<synchronous>, transform_indices = @transform_3, window_bounds = array<i64: 256, 128>}, {pipeline_mode = #tpu.pipeline_mode<synchronous>, transform_indices = @transform_4, window_bounds = array<i64: 1, 128>}, {pipeline_mode = #tpu.pipeline_mode<synchronous>, transform_indices = @transform_5, window_bounds = array<i64: 128, 32>}, {pipeline_mode = #tpu.pipeline_mode<synchronous>, transform_indices = @transform_6, window_bounds = array<i64: 1, 32>}, {transform_indices = @transform_7, window_bounds = array<i64: 24, 32>}]} {
    %c0 = arith.constant 0 : index
    %c0_0 = arith.constant 0 : index
    %0 = vector.load %arg2[%c0, %c0_0] : memref<64x256xf32, #tpu.memory_space<vmem>>, vector<64x256xf32>
    %c0_1 = arith.constant 0 : index
    %c0_2 = arith.constant 0 : index
    %1 = vector.load %arg3[%c0_1, %c0_2] : memref<1x256xf32, #tpu.memory_space<vmem>>, vector<1x256xf32>
    %c0_3 = arith.constant 0 : index
    %c0_4 = arith.constant 0 : index
    %2 = vector.load %arg4[%c0_3, %c0_4] : memref<256x128xf32, #tpu.memory_space<vmem>>, vector<256x128xf32>
    %c0_5 = arith.constant 0 : index
    %c0_6 = arith.constant 0 : index
    %3 = vector.load %arg5[%c0_5, %c0_6] : memref<1x128xf32, #tpu.memory_space<vmem>>, vector<1x128xf32>
    %c0_7 = arith.constant 0 : index
    %c0_8 = arith.constant 0 : index
    %4 = vector.load %arg6[%c0_7, %c0_8] : memref<128x32xf32, #tpu.memory_space<vmem>>, vector<128x32xf32>
    %c0_9 = arith.constant 0 : index
    %c0_10 = arith.constant 0 : index
    %5 = vector.load %arg7[%c0_9, %c0_10] : memref<1x32xf32, #tpu.memory_space<vmem>>, vector<1x32xf32>
    %c0_i32 = arith.constant 0 : i32
    %6 = tpu.assume_multiple %c0_i32, 24 : i32
    %7 = arith.index_cast %6 : i32 to index
    %c0_11 = arith.constant 0 : index
    %8 = vector.load %arg1[%7, %c0_11] : memref<24x64xf32, #tpu.memory_space<vmem>>, vector<24x64xf32>
    %cst = arith.constant dense<0.000000e+00> : vector<24x256xf32>
    %9 = tpu.matmul %8, %0, %cst {dimension_numbers = #tpu.dot_dimension_numbers<[1], [0], [0], [1], [0, 0, 1, 1], [], []>} : vector<24x64xf32>, vector<64x256xf32>, vector<24x256xf32> -> vector<24x256xf32>
    %10 = vector.broadcast %1 : vector<1x256xf32> to vector<24x256xf32>
    %11 = arith.addf %9, %10 : vector<24x256xf32>
    %cst_12 = arith.constant 0.000000e+00 : f32
    %12 = vector.broadcast %cst_12 : f32 to vector<24x256xf32>
    %13 = arith.maximumf %11, %12 : vector<24x256xf32>
    %cst_13 = arith.constant dense<0.000000e+00> : vector<24x128xf32>
    %14 = tpu.matmul %13, %2, %cst_13 {dimension_numbers = #tpu.dot_dimension_numbers<[1], [0], [0], [1], [0, 0, 1, 1], [], []>} : vector<24x256xf32>, vector<256x128xf32>, vector<24x128xf32> -> vector<24x128xf32>
    %15 = vector.broadcast %3 : vector<1x128xf32> to vector<24x128xf32>
    %16 = arith.addf %14, %15 : vector<24x128xf32>
    %cst_14 = arith.constant 0.000000e+00 : f32
    %17 = vector.broadcast %cst_14 : f32 to vector<24x128xf32>
    %18 = arith.maximumf %16, %17 : vector<24x128xf32>
    %cst_15 = arith.constant dense<0.000000e+00> : vector<24x32xf32>
    %19 = tpu.matmul %18, %4, %cst_15 {dimension_numbers = #tpu.dot_dimension_numbers<[1], [0], [0], [1], [0, 0, 1, 1], [], []>} : vector<24x128xf32>, vector<128x32xf32>, vector<24x32xf32> -> vector<24x32xf32>
    %20 = vector.broadcast %5 : vector<1x32xf32> to vector<24x32xf32>
    %21 = arith.addf %19, %20 : vector<24x32xf32>
    %22 = arith.index_cast %6 : i32 to index
    %c0_16 = arith.constant 0 : index
    %23 = vector.load %arg8[%22, %c0_16] : memref<24x32xf32, #tpu.memory_space<vmem>>, vector<24x32xf32>
    tpu.vector_store %arg8[%22, %c0_16], %21 {strides = array<i32>} : memref<24x32xf32, #tpu.memory_space<vmem>>, vector<24x32xf32>,
    return
  }
  func.func @transform_0(%arg0: i32) -> (i32, i32) {
    %c0_i32 = arith.constant 0 : i32
    %c0_i32_0 = arith.constant 0 : i32
    return %arg0, %c0_i32 : i32, i32
  }
  func.func @transform_1(%arg0: i32) -> (i32, i32) {
    %c0_i32 = arith.constant 0 : i32
    %c0_i32_0 = arith.constant 0 : i32
    %c0_i32_1 = arith.constant 0 : i32
    return %c0_i32, %c0_i32_0 : i32, i32
  }
  func.func @transform_2(%arg0: i32) -> (i32, i32) {
    %c0_i32 = arith.constant 0 : i32
    %c0_i32_0 = arith.constant 0 : i32
    %c0_i32_1 = arith.constant 0 : i32
    return %c0_i32, %c0_i32_0 : i32, i32
  }
  func.func @transform_3(%arg0: i32) -> (i32, i32) {
    %c0_i32 = arith.constant 0 : i32
    %c0_i32_0 = arith.constant 0 : i32
    %c0_i32_1 = arith.constant 0 : i32
    return %c0_i32, %c0_i32_0 : i32, i32
  }
  func.func @transform_4(%arg0: i32) -> (i32, i32) {
    %c0_i32 = arith.constant 0 : i32
    %c0_i32_0 = arith.constant 0 : i32
    %c0_i32_1 = arith.constant 0 : i32
    return %c0_i32, %c0_i32_0 : i32, i32
  }
  func.func @transform_5(%arg0: i32) -> (i32, i32) {
    %c0_i32 = arith.constant 0 : i32
    %c0_i32_0 = arith.constant 0 : i32
    %c0_i32_1 = arith.constant 0 : i32
    return %c0_i32, %c0_i32_0 : i32, i32
  }
  func.func @transform_6(%arg0: i32) -> (i32, i32) {
    %c0_i32 = arith.constant 0 : i32
    %c0_i32_0 = arith.constant 0 : i32
    %c0_i32_1 = arith.constant 0 : i32
    return %c0_i32, %c0_i32_0 : i32, i32
  }
  func.func @transform_7(%arg0: i32) -> (i32, i32) {
    %c0_i32 = arith.constant 0 : i32
    %c0_i32_0 = arith.constant 0 : i32
    return %arg0, %c0_i32 : i32, i32
  }
}

</mosaic_0001>

<llo_original>
// kernel: tpu_custom_call.1
$region0: #{tpu_custom_call.1}
  #allocation0 [shape = 'u32[]', space=smem, size = 0x4, offset = 0x4, fixed_abs, tag = 'smem constant byte address 0x4 - core index']
  #allocation1 [shape = 'u32[144,128]{1,0:T(1,128)}', space=vmem, size = 0x12000, scoped, tag = 'internal scratch']
  %s0 = inlined_call_operand.vmem [shape: f32[20,64], index: 0, kind: input, shape index: {}]
  %s1 = inlined_call_operand.vmem [shape: f32[64,256], index: 1, kind: input, shape index: {}]
  %s2 = inlined_call_operand.vmem [shape: f32[1,256], index: 2, kind: input, shape index: {}]
  %s3 = inlined_call_operand.hbm [shape: f32[256,128], index: 3, kind: input, shape index: {}]
  %s4 = inlined_call_operand.vmem [shape: f32[1,128], index: 4, kind: input, shape index: {}]
  %s5 = inlined_call_operand.vmem [shape: f32[128,32], index: 5, kind: input, shape index: {}]
  %s6 = inlined_call_operand.vmem [shape: f32[1,32], index: 6, kind: input, shape index: {}]
  %s7 = inlined_call_operand.hbm [shape: f32[20,32], index: 7, kind: output, shape index: {}]
  %s8 = sld [smem:[#allocation0]]
  $region42: #{tpu_custom_call.1} parent=0
    _
  %s10 = ssub.s32 1, %s8
  %s11 = scalar_select 0, %s10, %s8
  $region1: #{tpu_custom_call.1} parent=0
    #allocation2 [shape = 'u8[131072]{0}', space=vmem, size = 0x20000, scoped, tag = 'input window, operand 3, single buffered']
    #allocation3 [shape = 's32[1]{0}', space=sflag, size = 0x4, scoped, tag = 'scoped memory for tpu_custom_call.1']
    #allocation4 [shape = 's32[1]{0}', space=sflag, size = 0x4, scoped, tag = 'scoped memory for tpu_custom_call.1']
    #allocation5 [shape = 'u8[12288]{0}', space=vmem, size = 0x3000, scoped, tag = 'output window, operand 0, single buffered']
    %12 = vsyncpa [#allocation3], 0
    %13 = vsyncpa [#allocation4], 0
    // Predicated region
    $region2: #{tpu_custom_call.1} parent=1 // pred_check
      _
    $region3: #{tpu_custom_call.1} parent=1 // pred_check_branch
      %15 = sbr.rel (0) target = $region5
    $region4: #{tpu_custom_call.1} parent=1 // pred_region
      _
    $region5: #{tpu_custom_call.1} parent=1 // pred_fallthru
      _
    // Predicated region
    $region6: #{tpu_custom_call.1} parent=1 // pred_check
      _
    $region7: #{tpu_custom_call.1} parent=1 // pred_check_branch
      %17 = sbr.rel (0) target = $region9
    $region8: #{tpu_custom_call.1} parent=1 // pred_region
      _
    $region9: #{tpu_custom_call.1} parent=1 // pred_fallthru
      _
    // Predicated region
    $region10: #{tpu_custom_call.1} parent=1 // pred_check
      _
    $region11: #{tpu_custom_call.1} parent=1 // pred_check_branch
      %19 = sbr.rel (0) target = $region13
    $region12: #{tpu_custom_call.1} parent=1 // pred_region
      _
    $region13: #{tpu_custom_call.1} parent=1 // pred_fallthru
      _
    // Predicated region
    $region14: #{tpu_custom_call.1} parent=1 // pred_check
      _
    $region15: #{tpu_custom_call.1} parent=1 // pred_check_branch
      %21 = sbr.rel (0) target = $region17
    $region16: #{tpu_custom_call.1} parent=1 // pred_region
      %s23 = ssub.s32 4096, 4096
      %24 = vsyncadd [#allocation3], %s23
      %s25 = sshll.u32 [#allocation2], 4
      %s26 = int_to_ptr.vmem [resolvable:$true] %s25
      %31 = dma.hbm_to_vmem [thread:$0]  %s3, 4096, %s26, [#allocation3], 128, 128, 8
    $region17: #{tpu_custom_call.1} parent=1 // pred_fallthru
      _
    // Predicated region
    $region18: #{tpu_custom_call.1} parent=1 // pred_check
      _
    $region19: #{tpu_custom_call.1} parent=1 // pred_check_branch
      %33 = sbr.rel (0) target = $region21
    $region20: #{tpu_custom_call.1} parent=1 // pred_region
      _
    $region21: #{tpu_custom_call.1} parent=1 // pred_fallthru
      _
    // Predicated region
    $region22: #{tpu_custom_call.1} parent=1 // pred_check
      _
    $region23: #{tpu_custom_call.1} parent=1 // pred_check_branch
      %35 = sbr.rel (0) target = $region25
    $region24: #{tpu_custom_call.1} parent=1 // pred_region
      _
    $region25: #{tpu_custom_call.1} parent=1 // pred_fallthru
      _
    // Predicated region
    $region26: #{tpu_custom_call.1} parent=1 // pred_check
      _
    $region27: #{tpu_custom_call.1} parent=1 // pred_check_branch
      %37 = sbr.rel (0) target = $region29
    $region28: #{tpu_custom_call.1} parent=1 // pred_region
      _
    $region29: #{tpu_custom_call.1} parent=1 // pred_fallthru
      _
    // Predicated region
    $region30: #{tpu_custom_call.1} parent=1 // pred_check
      _
    $region31: #{tpu_custom_call.1} parent=1 // pred_check_branch
      %39 = sbr.rel (0) target = $region33
    $region32: #{tpu_custom_call.1} parent=1 // pred_region
      %40 = dma.done [#allocation3], 4096
    $region33: #{tpu_custom_call.1} parent=1 // pred_fallthru
      _
    %v41 = vld [vmem:[%s1] sm:$0xff]
    %v42 = vld [vmem:[%s1 + $0x8] sm:$0xff]
    %v43 = vld [vmem:[%s1 + $0x10] sm:$0xff]
    %v44 = vld [vmem:[%s1 + $0x18] sm:$0xff]
    %v45 = vld [vmem:[%s1 + $0x20] sm:$0xff]
    %v46 = vld [vmem:[%s1 + $0x28] sm:$0xff]
    %v47 = vld [vmem:[%s1 + $0x30] sm:$0xff]
    %v48 = vld [vmem:[%s1 + $0x38] sm:$0xff]
    %v49 = vld [vmem:[%s1 + $0x40] sm:$0xff]
    %v50 = vld [vmem:[%s1 + $0x48] sm:$0xff]
    %v51 = vld [vmem:[%s1 + $0x50] sm:$0xff]
    %v52 = vld [vmem:[%s1 + $0x58] sm:$0xff]
    %v53 = vld [vmem:[%s1 + $0x60] sm:$0xff]
    %v54 = vld [vmem:[%s1 + $0x68] sm:$0xff]
    %v55 = vld [vmem:[%s1 + $0x70] sm:$0xff]
    %v56 = vld [vmem:[%s1 + $0x78] sm:$0xff]
    %v57 = vld [vmem:[%s2] sm:$0x3]
    %v58 = vld [vmem:[#allocation2] sm:$0xff]
    %v59 = vld [vmem:[#allocation2 + $0x8] sm:$0xff]
    %v60 = vld [vmem:[#allocation2 + $0x10] sm:$0xff]
    %v61 = vld [vmem:[#allocation2 + $0x18] sm:$0xff]
    %v62 = vld [vmem:[#allocation2 + $0x20] sm:$0xff]
    %v63 = vld [vmem:[#allocation2 + $0x28] sm:$0xff]
    %v64 = vld [vmem:[#allocation2 + $0x30] sm:$0xff]
    %v65 = vld [vmem:[#allocation2 + $0x38] sm:$0xff]
    %v66 = vld [vmem:[#allocation2 + $0x40] sm:$0xff]
    %v67 = vld [vmem:[#allocation2 + $0x48] sm:$0xff]
    %v68 = vld [vmem:[#allocation2 + $0x50] sm:$0xff]
    %v69 = vld [vmem:[#allocation2 + $0x58] sm:$0xff]
    %v70 = vld [vmem:[#allocation2 + $0x60] sm:$0xff]
    %v71 = vld [vmem:[#allocation2 + $0x68] sm:$0xff]
    %v72 = vld [vmem:[#allocation2 + $0x70] sm:$0xff]
    %v73 = vld [vmem:[#allocation2 + $0x78] sm:$0xff]
    %v74 = vld [vmem:[#allocation2 + $0x80] sm:$0xff]
    %v75 = vld [vmem:[#allocation2 + $0x88] sm:$0xff]
    %v76 = vld [vmem:[#allocation2 + $0x90] sm:$0xff]
    %v77 = vld [vmem:[#allocation2 + $0x98] sm:$0xff]
    %v78 = vld [vmem:[#allocation2 + $0xa0] sm:$0xff]
    %v79 = vld [vmem:[#allocation2 + $0xa8] sm:$0xff]
    %v80 = vld [vmem:[#allocation2 + $0xb0] sm:$0xff]
    %v81 = vld [vmem:[#allocation2 + $0xb8] sm:$0xff]
    %v82 = vld [vmem:[#allocation2 + $0xc0] sm:$0xff]
    %v83 = vld [vmem:[#allocation2 + $0xc8] sm:$0xff]
    %v84 = vld [vmem:[#allocation2 + $0xd0] sm:$0xff]
    %v85 = vld [vmem:[#allocation2 + $0xd8] sm:$0xff]
    %v86 = vld [vmem:[#allocation2 + $0xe0] sm:$0xff]
    %v87 = vld [vmem:[#allocation2 + $0xe8] sm:$0xff]
    %v88 = vld [vmem:[#allocation2 + $0xf0] sm:$0xff]
    %v89 = vld [vmem:[#allocation2 + $0xf8] sm:$0xff]
    %v90 = vld [vmem:[%s4] sm:$0x1]
    %v91 = vld [vmem:[%s5] sm:$0xff]
    %v92 = vld [vmem:[%s5 + $0x8] sm:$0xff]
    %v93 = vld [vmem:[%s5 + $0x10] sm:$0xff]
    %v94 = vld [vmem:[%s5 + $0x18] sm:$0xff]
    %v95 = vld [vmem:[%s5 + $0x20] sm:$0xff]
    %v96 = vld [vmem:[%s5 + $0x28] sm:$0xff]
    %v97 = vld [vmem:[%s5 + $0x30] sm:$0xff]
    %v98 = vld [vmem:[%s5 + $0x38] sm:$0xff]
    %v99 = vld [vmem:[%s5 + $0x40] sm:$0xff]
    %v100 = vld [vmem:[%s5 + $0x48] sm:$0xff]
    %v101 = vld [vmem:[%s5 + $0x50] sm:$0xff]
    %v102 = vld [vmem:[%s5 + $0x58] sm:$0xff]
    %v103 = vld [vmem:[%s5 + $0x60] sm:$0xff]
    %v104 = vld [vmem:[%s5 + $0x68] sm:$0xff]
    %v105 = vld [vmem:[%s5 + $0x70] sm:$0xff]
    %v106 = vld [vmem:[%s5 + $0x78] sm:$0xff]
    %v107 = vld [vmem:[%s6] sm:$0x1]
    %v108 = vld [vmem:[%s0] sm:$0xff]
    %v109 = vld [vmem:[%s0 + $0x8] sm:$0xff]
    %v110 = vld [vmem:[%s0 + $0x10] sm:$0xff]
    %v112 = vlaneseq
    %v113 = vshrl.u32 %v112, 7
    %v114 = vsub.s32 0, %v113
    %v115 = vrot.slane %v57, %v114
    %v116 = vlaneseq
    %v117 = vshrl.u32 %v116, 7
    %v118 = vsub.s32 1, %v117
    %v119 = vrot.slane %v57, %v118
    %vm122 = vcmask 523264
    %v124 = vsel %vm122, %v108, 0
    %v127 = vsel %vm122, %v109, 0
    %v130 = vsel %vm122, %v110, 0
    %132 = vmatprep.subr.mxu0 0.0
    %133 = vmatpush1.msra.mxu0 0.0
    %134 = vmatprep.subr.mxu0 0.0
    %135 = vmatpush1.msra.mxu0 0.0
    %136 = vmatprep.subr.mxu0 0.0
    %137 = vmatpush1.msra.mxu0 0.0
    %138 = vmatprep.subr.mxu0 0.0
    %139 = vmatpush1.msra.mxu0 0.0
    %140 = vmatprep.subr.mxu0 0.0
    %141 = vmatpush1.msra.mxu0 0.0
    %142 = vmatprep.subr.mxu0 0.0
    %143 = vmatpush1.msra.mxu0 0.0
    %144 = vmatprep.subr.mxu0 0.0
    %145 = vmatpush1.msra.mxu0 0.0
    %146 = vmatprep.subr.mxu0 0.0
    %147 = vmatpush1.msra.mxu0 0.0
    %148 = vmatprep.subr.mxu0 %v56
    %149 = vmatpush1.msra.mxu0 %v55
    %150 = vmatprep.subr.mxu0 %v54
    %151 = vmatpush1.msra.mxu0 %v53
    %152 = vmatprep.subr.mxu0 %v52
    %153 = vmatpush1.msra.mxu0 %v51
    %154 = vmatprep.subr.mxu0 %v50
    %155 = vmatpush1.msra.mxu0 %v49
    %156 = vmatprep.subr.mxu0 %v48
    %157 = vmatpush1.msra.mxu0 %v47
    %158 = vmatprep.subr.mxu0 %v46
    %159 = vmatpush1.msra.mxu0 %v45
    %160 = vmatprep.subr.mxu0 %v44
    %161 = vmatpush1.msra.mxu0 %v43
    %162 = vmatprep.subr.mxu0 %v42
    %163 = vmatpush1.msra.mxu0 %v41
    %164 = vmatprep.subr.mxu0 0.0
    %165 = vmatpush2.msra.mxu0 0.0
    %166 = vmatprep.subr.mxu0 0.0
    %167 = vmatpush2.msra.mxu0 0.0
    %168 = vmatprep.subr.mxu0 0.0
    %169 = vmatpush2.msra.mxu0 0.0
    %170 = vmatprep.subr.mxu0 0.0
    %171 = vmatpush2.msra.mxu0 0.0
    %172 = vmatprep.subr.mxu0 0.0
    %173 = vmatpush2.msra.mxu0 0.0
    %174 = vmatprep.subr.mxu0 0.0
    %175 = vmatpush2.msra.mxu0 0.0
    %176 = vmatprep.subr.mxu0 0.0
    %177 = vmatpush2.msra.mxu0 0.0
    %178 = vmatprep.subr.mxu0 0.0
    %179 = vmatpush2.msra.mxu0 0.0
    %180 = vmatprep.subr.mxu0 0.0
    %181 = vmatpush2.msra.mxu0 0.0
    %182 = vmatprep.subr.mxu0 0.0
    %183 = vmatpush2.msra.mxu0 0.0
    %184 = vmatprep.subr.mxu0 0.0
    %185 = vmatpush2.msra.mxu0 0.0
    %186 = vmatprep.subr.mxu0 0.0
    %187 = vmatpush2.msra.mxu0 0.0
    %188 = vmatprep.subr.mxu0 0.0
    %189 = vmatpush2.msra.mxu0 0.0
    %190 = vmatprep.subr.mxu0 0.0
    %191 = vmatpush2.msra.mxu0 0.0
    %192 = vmatprep.subr.mxu0 0.0
    %193 = vmatpush2.msra.mxu0 0.0
    %194 = vmatprep.subr.mxu0 0.0
    %195 = vmatpush2.msra.mxu0 0.0
    %196 = vmatprep.mubr.f32.mxu0 0.0
    %197 = vmatmul.mubr.f32.gmra.mxu0 %v124
    %v198 = vpop.f32.mrf.mxu0
    %v199 = vadd.f32 %v115, %v198
    %v200 = vpop.f32.mrf.mxu0
    %v201 = vadd.f32 %v119, %v200
    %202 = vmatprep.mubr.f32.mxu0 0.0
    %203 = vmatmul.mubr.f32.gmra.mxu0 %v127
    %v204 = vpop.f32.mrf.mxu0
    %v205 = vadd.f32 %v115, %v204
    %v206 = vpop.f32.mrf.mxu0
    %v207 = vadd.f32 %v119, %v206
    %208 = vmatprep.mubr.f32.mxu0 0.0
    %209 = vmatmul.mubr.f32.gmra.mxu0 %v130
    %v210 = vpop.f32.mrf.mxu0
    %v211 = vadd.f32 %v115, %v210
    %v212 = vpop.f32.mrf.mxu0
    %v213 = vadd.f32 %v119, %v212
    %214 = vdwg.mxu0
    %v215 = vmax.f32 %v199, 0.0
    %v216 = vmax.f32 %v201, 0.0
    %v217 = vmax.f32 %v205, 0.0
    %v218 = vmax.f32 %v207, 0.0
    %v219 = vmax.f32 %v211, 0.0
    %v220 = vmax.f32 %v213, 0.0
    %v222 = vlaneseq
    %v223 = vshrl.u32 %v222, 7
    %v224 = vsub.s32 0, %v223
    %v225 = vrot.slane %v90, %v224
    %227 = vmatprep.subr.mxu0 0.0
    %228 = vmatpush1.msra.mxu0 %v73
    %229 = vmatprep.subr.mxu0 0.0
    %230 = vmatpush1.msra.mxu0 %v72
    %231 = vmatprep.subr.mxu0 0.0
    %232 = vmatpush1.msra.mxu0 %v71
    %233 = vmatprep.subr.mxu0 0.0
    %234 = vmatpush1.msra.mxu0 %v70
    %235 = vmatprep.subr.mxu0 0.0
    %236 = vmatpush1.msra.mxu0 %v69
    %237 = vmatprep.subr.mxu0 0.0
    %238 = vmatpush1.msra.mxu0 %v68
    %239 = vmatprep.subr.mxu0 0.0
    %240 = vmatpush1.msra.mxu0 %v67
    %241 = vmatprep.subr.mxu0 0.0
    %242 = vmatpush1.msra.mxu0 %v66
    %243 = vmatprep.subr.mxu0 0.0
    %244 = vmatpush1.msra.mxu0 %v65
    %245 = vmatprep.subr.mxu0 0.0
    %246 = vmatpush1.msra.mxu0 %v64
    %247 = vmatprep.subr.mxu0 0.0
    %248 = vmatpush1.msra.mxu0 %v63
    %249 = vmatprep.subr.mxu0 0.0
    %250 = vmatpush1.msra.mxu0 %v62
    %251 = vmatprep.subr.mxu0 0.0
    %252 = vmatpush1.msra.mxu0 %v61
    %253 = vmatprep.subr.mxu0 0.0
    %254 = vmatpush1.msra.mxu0 %v60
    %255 = vmatprep.subr.mxu0 0.0
    %256 = vmatpush1.msra.mxu0 %v59
    %257 = vmatprep.subr.mxu0 0.0
    %258 = vmatpush1.msra.mxu0 %v58
    %259 = vmatprep.subr.mxu0 0.0
    %260 = vmatpush2.msra.mxu0 %v89
    %261 = vmatprep.subr.mxu0 0.0
    %262 = vmatpush2.msra.mxu0 %v88
    %263 = vmatprep.subr.mxu0 0.0
    %264 = vmatpush2.msra.mxu0 %v87
    %265 = vmatprep.subr.mxu0 0.0
    %266 = vmatpush2.msra.mxu0 %v86
    %267 = vmatprep.subr.mxu0 0.0
    %268 = vmatpush2.msra.mxu0 %v85
    %269 = vmatprep.subr.mxu0 0.0
    %270 = vmatpush2.msra.mxu0 %v84
    %271 = vmatprep.subr.mxu0 0.0
    %272 = vmatpush2.msra.mxu0 %v83
    %273 = vmatprep.subr.mxu0 0.0
    %274 = vmatpush2.msra.mxu0 %v82
    %275 = vmatprep.subr.mxu0 0.0
    %276 = vmatpush2.msra.mxu0 %v81
    %277 = vmatprep.subr.mxu0 0.0
    %278 = vmatpush2.msra.mxu0 %v80
    %279 = vmatprep.subr.mxu0 0.0
    %280 = vmatpush2.msra.mxu0 %v79
    %281 = vmatprep.subr.mxu0 0.0
    %282 = vmatpush2.msra.mxu0 %v78
    %283 = vmatprep.subr.mxu0 0.0
    %284 = vmatpush2.msra.mxu0 %v77
    %285 = vmatprep.subr.mxu0 0.0
    %286 = vmatpush2.msra.mxu0 %v76
    %287 = vmatprep.subr.mxu0 0.0
    %288 = vmatpush2.msra.mxu0 %v75
    %289 = vmatprep.subr.mxu0 0.0
    %290 = vmatpush2.msra.mxu0 %v74
    %291 = vmatprep.mubr.f32.mxu0 %v216
    %292 = vmatmul.mubr.f32.gmra.mxu0 %v215
    %v293 = vpop.f32.mrf.mxu0
    %v294 = vadd.f32 %v225, %v293
    %v295 = vpop.f32.mrf.mxu0
    %296 = vmatprep.mubr.f32.mxu0 %v218
    %297 = vmatmul.mubr.f32.gmra.mxu0 %v217
    %v298 = vpop.f32.mrf.mxu0
    %v299 = vadd.f32 %v225, %v298
    %v300 = vpop.f32.mrf.mxu0
    %301 = vmatprep.mubr.f32.mxu0 %v220
    %302 = vmatmul.mubr.f32.gmra.mxu0 %v219
    %v303 = vpop.f32.mrf.mxu0
    %v304 = vadd.f32 %v225, %v303
    %v305 = vpop.f32.mrf.mxu0
    %306 = vdwg.mxu0
    %v307 = vmax.f32 %v294, 0.0
    %v308 = vmax.f32 %v299, 0.0
    %v309 = vmax.f32 %v304, 0.0
    %v311 = vlaneseq
    %v312 = vshrl.u32 %v311, 7
    %v313 = vsub.s32 0, %v312
    %v314 = vrot.slane %v107, %v313
    %316 = vmatprep.subr.mxu0 0.0
    %317 = vmatpush1.msra.mxu0 %v106
    %318 = vmatprep.subr.mxu0 0.0
    %319 = vmatpush1.msra.mxu0 %v105
    %320 = vmatprep.subr.mxu0 0.0
    %321 = vmatpush1.msra.mxu0 %v104
    %322 = vmatprep.subr.mxu0 0.0
    %323 = vmatpush1.msra.mxu0 %v103
    %324 = vmatprep.subr.mxu0 0.0
    %325 = vmatpush1.msra.mxu0 %v102
    %326 = vmatprep.subr.mxu0 0.0
    %327 = vmatpush1.msra.mxu0 %v101
    %328 = vmatprep.subr.mxu0 0.0
    %329 = vmatpush1.msra.mxu0 %v100
    %330 = vmatprep.subr.mxu0 0.0
    %331 = vmatpush1.msra.mxu0 %v99
    %332 = vmatprep.subr.mxu0 0.0
    %333 = vmatpush1.msra.mxu0 %v98
    %334 = vmatprep.subr.mxu0 0.0
    %335 = vmatpush1.msra.mxu0 %v97
    %336 = vmatprep.subr.mxu0 0.0
    %337 = vmatpush1.msra.mxu0 %v96
    %338 = vmatprep.subr.mxu0 0.0
    %339 = vmatpush1.msra.mxu0 %v95
    %340 = vmatprep.subr.mxu0 0.0
    %341 = vmatpush1.msra.mxu0 %v94
    %342 = vmatprep.subr.mxu0 0.0
    %343 = vmatpush1.msra.mxu0 %v93
    %344 = vmatprep.subr.mxu0 0.0
    %345 = vmatpush1.msra.mxu0 %v92
    %346 = vmatprep.subr.mxu0 0.0
    %347 = vmatpush1.msra.mxu0 %v91
    %348 = vmatprep.subr.mxu0 0.0
    %349 = vmatpush2.msra.mxu0 0.0
    %350 = vmatprep.subr.mxu0 0.0
    %351 = vmatpush2.msra.mxu0 0.0
    %352 = vmatprep.subr.mxu0 0.0
    %353 = vmatpush2.msra.mxu0 0.0
    %354 = vmatprep.subr.mxu0 0.0
    %355 = vmatpush2.msra.mxu0 0.0
    %356 = vmatprep.subr.mxu0 0.0
    %357 = vmatpush2.msra.mxu0 0.0
    %358 = vmatprep.subr.mxu0 0.0
    %359 = vmatpush2.msra.mxu0 0.0
    %360 = vmatprep.subr.mxu0 0.0
    %361 = vmatpush2.msra.mxu0 0.0
    %362 = vmatprep.subr.mxu0 0.0
    %363 = vmatpush2.msra.mxu0 0.0
    %364 = vmatprep.subr.mxu0 0.0
    %365 = vmatpush2.msra.mxu0 0.0
    %366 = vmatprep.subr.mxu0 0.0
    %367 = vmatpush2.msra.mxu0 0.0
    %368 = vmatprep.subr.mxu0 0.0
    %369 = vmatpush2.msra.mxu0 0.0
    %370 = vmatprep.subr.mxu0 0.0
    %371 = vmatpush2.msra.mxu0 0.0
    %372 = vmatprep.subr.mxu0 0.0
    %373 = vmatpush2.msra.mxu0 0.0
    %374 = vmatprep.subr.mxu0 0.0
    %375 = vmatpush2.msra.mxu0 0.0
    %376 = vmatprep.subr.mxu0 0.0
    %377 = vmatpush2.msra.mxu0 0.0
    %378 = vmatprep.subr.mxu0 0.0
    %379 = vmatpush2.msra.mxu0 0.0
    %380 = vmatprep.mubr.f32.mxu0 0.0
    %381 = vmatmul.mubr.f32.gmra.mxu0 %v307
    %v382 = vpop.f32.mrf.mxu0
    %v383 = vadd.f32 %v314, %v382
    %v384 = vpop.f32.mrf.mxu0
    %385 = vmatprep.mubr.f32.mxu0 0.0
    %386 = vmatmul.mubr.f32.gmra.mxu0 %v308
    %v387 = vpop.f32.mrf.mxu0
    %v388 = vadd.f32 %v314, %v387
    %v389 = vpop.f32.mrf.mxu0
    %390 = vmatprep.mubr.f32.mxu0 0.0
    %391 = vmatmul.mubr.f32.gmra.mxu0 %v309
    %v392 = vpop.f32.mrf.mxu0
    %v393 = vadd.f32 %v314, %v392
    %v394 = vpop.f32.mrf.mxu0
    %395 = vdwg.mxu0
    %vm396 = vcmask 261120
    %397 = vst.msk [vmem:[#allocation5] sm:$0xff] %vm396, %v383
    %398 = vst.msk [vmem:[#allocation5 + $0x8] sm:$0xff] %vm396, %v388
    %399 = vst.msk [vmem:[#allocation5 + $0x10] sm:$0xff] %vm396, %v393
    // Predicated region
    $region34: #{tpu_custom_call.1} parent=1 // pred_check
      _
    $region35: #{tpu_custom_call.1} parent=1 // pred_check_branch
      %401 = sbr.rel (0) target = $region37
    $region36: #{tpu_custom_call.1} parent=1 // pred_region
      %s403 = ssub.s32 384, 384
      %404 = vsyncadd [#allocation4], %s403
      %s405 = sshll.u32 [#allocation5], 4
      %s406 = int_to_ptr.vmem [resolvable:$true] %s405
      %411 = dma.vmem_to_hbm [thread:$0]  %s406, 384, %s7, [#allocation4], 128, 128, 8
    $region37: #{tpu_custom_call.1} parent=1 // pred_fallthru
      _
    // Predicated region
    $region38: #{tpu_custom_call.1} parent=1 // pred_check
      _
    $region39: #{tpu_custom_call.1} parent=1 // pred_check_branch
      %413 = sbr.rel (0) target = $region41
    $region40: #{tpu_custom_call.1} parent=1 // pred_region
      %414 = dma.done [#allocation4], 384
    $region41: #{tpu_custom_call.1} parent=1 // pred_fallthru
      _
    %415 = vsyncpa [#allocation3], 1
    %416 = vsyncpa [#allocation4], 1

// kernel: tpu_custom_call.1
$region0: #{tpu_custom_call.1}
  #allocation0 [shape = 'u32[]', space=smem, size = 0x4, offset = 0x4, fixed_abs, tag = 'smem constant byte address 0x4 - core index']
  #allocation1 [shape = 'u32[144,128]{1,0:T(1,128)}', space=vmem, size = 0x12000, scoped, tag = 'internal scratch']
  %s0 = inlined_call_operand.vmem [shape: f32[20,64], index: 0, kind: input, shape index: {}]
  %s1 = inlined_call_operand.vmem [shape: f32[64,256], index: 1, kind: input, shape index: {}]
  %s2 = inlined_call_operand.vmem [shape: f32[1,256], index: 2, kind: input, shape index: {}]
  %s3 = inlined_call_operand.hbm [shape: f32[256,128], index: 3, kind: input, shape index: {}]
  %s4 = inlined_call_operand.vmem [shape: f32[1,128], index: 4, kind: input, shape index: {}]
  %s5 = inlined_call_operand.vmem [shape: f32[128,32], index: 5, kind: input, shape index: {}]
  %s6 = inlined_call_operand.vmem [shape: f32[1,32], index: 6, kind: input, shape index: {}]
  %s7 = inlined_call_operand.hbm [shape: f32[20,32], index: 7, kind: output, shape index: {}]
  %s8 = sld [smem:[#allocation0]]
  $region42: #{tpu_custom_call.1} parent=0
    _
  %s10 = ssub.s32 1, %s8
  %s11 = scalar_select 0, %s10, %s8
  $region1: #{tpu_custom_call.1} parent=0
    #allocation2 [shape = 'u8[131072]{0}', space=vmem, size = 0x20000, scoped, tag = 'input window, operand 3, single buffered']
    #allocation3 [shape = 's32[1]{0}', space=sflag, size = 0x4, scoped, tag = 'scoped memory for tpu_custom_call.1']
    #allocation4 [shape = 's32[1]{0}', space=sflag, size = 0x4, scoped, tag = 'scoped memory for tpu_custom_call.1']
    #allocation5 [shape = 'u8[12288]{0}', space=vmem, size = 0x3000, scoped, tag = 'output window, operand 0, single buffered']
    %12 = vsyncpa [#allocation3], 0
    %13 = vsyncpa [#allocation4], 0
    // Predicated region
    $region2: #{tpu_custom_call.1} parent=1 // pred_check
      _
    $region3: #{tpu_custom_call.1} parent=1 // pred_check_branch
      %15 = sbr.rel (0) target = $region5
    $region4: #{tpu_custom_call.1} parent=1 // pred_region
      _
    $region5: #{tpu_custom_call.1} parent=1 // pred_fallthru
      _
    // Predicated region
    $region6: #{tpu_custom_call.1} parent=1 // pred_check
      _
    $region7: #{tpu_custom_call.1} parent=1 // pred_check_branch
      %17 = sbr.rel (0) target = $region9
    $region8: #{tpu_custom_call.1} parent=1 // pred_region
      _
    $region9: #{tpu_custom_call.1} parent=1 // pred_fallthru
      _
    // Predicated region
    $region10: #{tpu_custom_call.1} parent=1 // pred_check
      _
    $region11: #{tpu_custom_call.1} parent=1 // pred_check_branch
      %19 = sbr.rel (0) target = $region13
    $region12: #{tpu_custom_call.1} parent=1 // pred_region
      _
    $region13: #{tpu_custom_call.1} parent=1 // pred_fallthru
      _
    // Predicated region
    $region14: #{tpu_custom_call.1} parent=1 // pred_check
      _
    $region15: #{tpu_custom_call.1} parent=1 // pred_check_branch
      %21 = sbr.rel (0) target = $region17
    $region16: #{tpu_custom_call.1} parent=1 // pred_region
      %s23 = ssub.s32 4096, 4096
      %24 = vsyncadd [#allocation3], %s23
      %s25 = sshll.u32 [#allocation2], 4
      %s26 = int_to_ptr.vmem [resolvable:$true] %s25
      %31 = dma.hbm_to_vmem [thread:$0]  %s3, 4096, %s26, [#allocation3], 128, 128, 8
    $region17: #{tpu_custom_call.1} parent=1 // pred_fallthru
      _
    // Predicated region
    $region18: #{tpu_custom_call.1} parent=1 // pred_check
      _
    $region19: #{tpu_custom_call.1} parent=1 // pred_check_branch
      %33 = sbr.rel (0) target = $region21
    $region20: #{tpu_custom_call.1} parent=1 // pred_region
      _
    $region21: #{tpu_custom_call.1} parent=1 // pred_fallthru
      _
    // Predicated region
    $region22: #{tpu_custom_call.1} parent=1 // pred_check
      _
    $region23: #{tpu_custom_call.1} parent=1 // pred_check_branch
      %35 = sbr.rel (0) target = $region25
    $region24: #{tpu_custom_call.1} parent=1 // pred_region
      _
    $region25: #{tpu_custom_call.1} parent=1 // pred_fallthru
      _
    // Predicated region
    $region26: #{tpu_custom_call.1} parent=1 // pred_check
      _
    $region27: #{tpu_custom_call.1} parent=1 // pred_check_branch
      %37 = sbr.rel (0) target = $region29
    $region28: #{tpu_custom_call.1} parent=1 // pred_region
      _
    $region29: #{tpu_custom_call.1} parent=1 // pred_fallthru
      _
    // Predicated region
    $region30: #{tpu_custom_call.1} parent=1 // pred_check
      _
    $region31: #{tpu_custom_call.1} parent=1 // pred_check_branch
      %39 = sbr.rel (0) target = $region33
    $region32: #{tpu_custom_call.1} parent=1 // pred_region
      %40 = dma.done [#allocation3], 4096
    $region33: #{tpu_custom_call.1} parent=1 // pred_fallthru
      _
    %v41 = vld [vmem:[%s1] sm:$0xff]
    %v42 = vld [vmem:[%s1 + $0x8] sm:$0xff]
    %v43 = vld [vmem:[%s1 + $0x10] sm:$0xff]
    %v44 = vld [vmem:[%s1 + $0x18] sm:$0xff]
    %v45 = vld [vmem:[%s1 + $0x20] sm:$0xff]
    %v46 = vld [vmem:[%s1 + $0x28] sm:$0xff]
    %v47 = vld [vmem:[%s1 + $0x30] sm:$0xff]
    %v48 = vld [vmem:[%s1 + $0x38] sm:$0xff]
    %v49 = vld [vmem:[%s1 + $0x40] sm:$0xff]
    %v50 = vld [vmem:[%s1 + $0x48] sm:$0xff]
    %v51 = vld [vmem:[%s1 + $0x50] sm:$0xff]
    %v52 = vld [vmem:[%s1 + $0x58] sm:$0xff]
    %v53 = vld [vmem:[%s1 + $0x60] sm:$0xff]
    %v54 = vld [vmem:[%s1 + $0x68] sm:$0xff]
    %v55 = vld [vmem:[%s1 + $0x70] sm:$0xff]
    %v56 = vld [vmem:[%s1 + $0x78] sm:$0xff]
    %v57 = vld [vmem:[%s2] sm:$0x3]
    %v58 = vld [vmem:[#allocation2] sm:$0xff]
    %v59 = vld [vmem:[#allocation2 + $0x8] sm:$0xff]
    %v60 = vld [vmem:[#allocation2 + $0x10] sm:$0xff]
    %v61 = vld [vmem:[#allocation2 + $0x18] sm:$0xff]
    %v62 = vld [vmem:[#allocation2 + $0x20] sm:$0xff]
    %v63 = vld [vmem:[#allocation2 + $0x28] sm:$0xff]
    %v64 = vld [vmem:[#allocation2 + $0x30] sm:$0xff]
    %v65 = vld [vmem:[#allocation2 + $0x38] sm:$0xff]
    %v66 = vld [vmem:[#allocation2 + $0x40] sm:$0xff]
    %v67 = vld [vmem:[#allocation2 + $0x48] sm:$0xff]
    %v68 = vld [vmem:[#allocation2 + $0x50] sm:$0xff]
    %v69 = vld [vmem:[#allocation2 + $0x58] sm:$0xff]
    %v70 = vld [vmem:[#allocation2 + $0x60] sm:$0xff]
    %v71 = vld [vmem:[#allocation2 + $0x68] sm:$0xff]
    %v72 = vld [vmem:[#allocation2 + $0x70] sm:$0xff]
    %v73 = vld [vmem:[#allocation2 + $0x78] sm:$0xff]
    %v74 = vld [vmem:[#allocation2 + $0x80] sm:$0xff]
    %v75 = vld [vmem:[#allocation2 + $0x88] sm:$0xff]
    %v76 = vld [vmem:[#allocation2 + $0x90] sm:$0xff]
    %v77 = vld [vmem:[#allocation2 + $0x98] sm:$0xff]
    %v78 = vld [vmem:[#allocation2 + $0xa0] sm:$0xff]
    %v79 = vld [vmem:[#allocation2 + $0xa8] sm:$0xff]
    %v80 = vld [vmem:[#allocation2 + $0xb0] sm:$0xff]
    %v81 = vld [vmem:[#allocation2 + $0xb8] sm:$0xff]
    %v82 = vld [vmem:[#allocation2 + $0xc0] sm:$0xff]
    %v83 = vld [vmem:[#allocation2 + $0xc8] sm:$0xff]
    %v84 = vld [vmem:[#allocation2 + $0xd0] sm:$0xff]
    %v85 = vld [vmem:[#allocation2 + $0xd8] sm:$0xff]
    %v86 = vld [vmem:[#allocation2 + $0xe0] sm:$0xff]
    %v87 = vld [vmem:[#allocation2 + $0xe8] sm:$0xff]
    %v88 = vld [vmem:[#allocation2 + $0xf0] sm:$0xff]
    %v89 = vld [vmem:[#allocation2 + $0xf8] sm:$0xff]
    %v90 = vld [vmem:[%s4] sm:$0x1]
    %v91 = vld [vmem:[%s5] sm:$0xff]
    %v92 = vld [vmem:[%s5 + $0x8] sm:$0xff]
    %v93 = vld [vmem:[%s5 + $0x10] sm:$0xff]
    %v94 = vld [vmem:[%s5 + $0x18] sm:$0xff]
    %v95 = vld [vmem:[%s5 + $0x20] sm:$0xff]
    %v96 = vld [vmem:[%s5 + $0x28] sm:$0xff]
    %v97 = vld [vmem:[%s5 + $0x30] sm:$0xff]
    %v98 = vld [vmem:[%s5 + $0x38] sm:$0xff]
    %v99 = vld [vmem:[%s5 + $0x40] sm:$0xff]
    %v100 = vld [vmem:[%s5 + $0x48] sm:$0xff]
    %v101 = vld [vmem:[%s5 + $0x50] sm:$0xff]
    %v102 = vld [vmem:[%s5 + $0x58] sm:$0xff]
    %v103 = vld [vmem:[%s5 + $0x60] sm:$0xff]
    %v104 = vld [vmem:[%s5 + $0x68] sm:$0xff]
    %v105 = vld [vmem:[%s5 + $0x70] sm:$0xff]
    %v106 = vld [vmem:[%s5 + $0x78] sm:$0xff]
    %v107 = vld [vmem:[%s6] sm:$0x1]
    %v108 = vld [vmem:[%s0] sm:$0xff]
    %v109 = vld [vmem:[%s0 + $0x8] sm:$0xff]
    %v110 = vld [vmem:[%s0 + $0x10] sm:$0xff]
    %v112 = vlaneseq
    %v113 = vshrl.u32 %v112, 7
    %v114 = vsub.s32 0, %v113
    %v115 = vrot.slane %v57, %v114
    %v116 = vlaneseq
    %v117 = vshrl.u32 %v116, 7
    %v118 = vsub.s32 1, %v117
    %v119 = vrot.slane %v57, %v118
    %vm122 = vcmask 523264
    %v124 = vsel %vm122, %v108, 0
    %v127 = vsel %vm122, %v109, 0
    %v130 = vsel %vm122, %v110, 0
    %132 = vmatprep.subr.mxu0 0.0
    %133 = vmatpush1.msra.mxu0 0.0
    %134 = vmatprep.subr.mxu0 0.0
    %135 = vmatpush1.msra.mxu0 0.0
    %136 = vmatprep.subr.mxu0 0.0
    %137 = vmatpush1.msra.mxu0 0.0
    %138 = vmatprep.subr.mxu0 0.0
    %139 = vmatpush1.msra.mxu0 0.0
    %140 = vmatprep.subr.mxu0 0.0
    %141 = vmatpush1.msra.mxu0 0.0
    %142 = vmatprep.subr.mxu0 0.0
    %143 = vmatpush1.msra.mxu0 0.0
    %144 = vmatprep.subr.mxu0 0.0
    %145 = vmatpush1.msra.mxu0 0.0
    %146 = vmatprep.subr.mxu0 0.0
    %147 = vmatpush1.msra.mxu0 0.0
    %148 = vmatprep.subr.mxu0 %v56
    %149 = vmatpush1.msra.mxu0 %v55
    %150 = vmatprep.subr.mxu0 %v54
    %151 = vmatpush1.msra.mxu0 %v53
    %152 = vmatprep.subr.mxu0 %v52
    %153 = vmatpush1.msra.mxu0 %v51
    %154 = vmatprep.subr.mxu0 %v50
    %155 = vmatpush1.msra.mxu0 %v49
    %156 = vmatprep.subr.mxu0 %v48
    %157 = vmatpush1.msra.mxu0 %v47
    %158 = vmatprep.subr.mxu0 %v46
    %159 = vmatpush1.msra.mxu0 %v45
    %160 = vmatprep.subr.mxu0 %v44
    %161 = vmatpush1.msra.mxu0 %v43
    %162 = vmatprep.subr.mxu0 %v42
    %163 = vmatpush1.msra.mxu0 %v41
    %164 = vmatprep.subr.mxu0 0.0
    %165 = vmatpush2.msra.mxu0 0.0
    %166 = vmatprep.subr.mxu0 0.0
    %167 = vmatpush2.msra.mxu0 0.0
    %168 = vmatprep.subr.mxu0 0.0
    %169 = vmatpush2.msra.mxu0 0.0
    %170 = vmatprep.subr.mxu0 0.0
    %171 = vmatpush2.msra.mxu0 0.0
    %172 = vmatprep.subr.mxu0 0.0
    %173 = vmatpush2.msra.mxu0 0.0
    %174 = vmatprep.subr.mxu0 0.0
    %175 = vmatpush2.msra.mxu0 0.0
    %176 = vmatprep.subr.mxu0 0.0
    %177 = vmatpush2.msra.mxu0 0.0
    %178 = vmatprep.subr.mxu0 0.0
    %179 = vmatpush2.msra.mxu0 0.0
    %180 = vmatprep.subr.mxu0 0.0
    %181 = vmatpush2.msra.mxu0 0.0
    %182 = vmatprep.subr.mxu0 0.0
    %183 = vmatpush2.msra.mxu0 0.0
    %184 = vmatprep.subr.mxu0 0.0
    %185 = vmatpush2.msra.mxu0 0.0
    %186 = vmatprep.subr.mxu0 0.0
    %187 = vmatpush2.msra.mxu0 0.0
    %188 = vmatprep.subr.mxu0 0.0
    %189 = vmatpush2.msra.mxu0 0.0
    %190 = vmatprep.subr.mxu0 0.0
    %191 = vmatpush2.msra.mxu0 0.0
    %192 = vmatprep.subr.mxu0 0.0
    %193 = vmatpush2.msra.mxu0 0.0
    %194 = vmatprep.subr.mxu0 0.0
    %195 = vmatpush2.msra.mxu0 0.0
    %196 = vmatprep.mubr.f32.mxu0 0.0
    %197 = vmatmul.mubr.f32.gmra.mxu0 %v124
    %v198 = vpop.f32.mrf.mxu0
    %v199 = vadd.f32 %v115, %v198
    %v200 = vpop.f32.mrf.mxu0
    %v201 = vadd.f32 %v119, %v200
    %202 = vmatprep.mubr.f32.mxu0 0.0
    %203 = vmatmul.mubr.f32.gmra.mxu0 %v127
    %v204 = vpop.f32.mrf.mxu0
    %v205 = vadd.f32 %v115, %v204
    %v206 = vpop.f32.mrf.mxu0
    %v207 = vadd.f32 %v119, %v206
    %208 = vmatprep.mubr.f32.mxu0 0.0
    %209 = vmatmul.mubr.f32.gmra.mxu0 %v130
    %v210 = vpop.f32.mrf.mxu0
    %v211 = vadd.f32 %v115, %v210
    %v212 = vpop.f32.mrf.mxu0
    %v213 = vadd.f32 %v119, %v212
    %214 = vdwg.mxu0
    %v215 = vmax.f32 %v199, 0.0
    %v216 = vmax.f32 %v201, 0.0
    %v217 = vmax.f32 %v205, 0.0
    %v218 = vmax.f32 %v207, 0.0
    %v219 = vmax.f32 %v211, 0.0
    %v220 = vmax.f32 %v213, 0.0
    %v222 = vlaneseq
    %v223 = vshrl.u32 %v222, 7
    %v224 = vsub.s32 0, %v223
    %v225 = vrot.slane %v90, %v224
    %227 = vmatprep.subr.mxu0 0.0
    %228 = vmatpush1.msra.mxu0 %v73
    %229 = vmatprep.subr.mxu0 0.0
    %230 = vmatpush1.msra.mxu0 %v72
    %231 = vmatprep.subr.mxu0 0.0
    %232 = vmatpush1.msra.mxu0 %v71
    %233 = vmatprep.subr.mxu0 0.0
    %234 = vmatpush1.msra.mxu0 %v70
    %235 = vmatprep.subr.mxu0 0.0
    %236 = vmatpush1.msra.mxu0 %v69
    %237 = vmatprep.subr.mxu0 0.0
    %238 = vmatpush1.msra.mxu0 %v68
    %239 = vmatprep.subr.mxu0 0.0
    %240 = vmatpush1.msra.mxu0 %v67
    %241 = vmatprep.subr.mxu0 0.0
    %242 = vmatpush1.msra.mxu0 %v66
    %243 = vmatprep.subr.mxu0 0.0
    %244 = vmatpush1.msra.mxu0 %v65
    %245 = vmatprep.subr.mxu0 0.0
    %246 = vmatpush1.msra.mxu0 %v64
    %247 = vmatprep.subr.mxu0 0.0
    %248 = vmatpush1.msra.mxu0 %v63
    %249 = vmatprep.subr.mxu0 0.0
    %250 = vmatpush1.msra.mxu0 %v62
    %251 = vmatprep.subr.mxu0 0.0
    %252 = vmatpush1.msra.mxu0 %v61
    %253 = vmatprep.subr.mxu0 0.0
    %254 = vmatpush1.msra.mxu0 %v60
    %255 = vmatprep.subr.mxu0 0.0
    %256 = vmatpush1.msra.mxu0 %v59
    %257 = vmatprep.subr.mxu0 0.0
    %258 = vmatpush1.msra.mxu0 %v58
    %259 = vmatprep.subr.mxu0 0.0
    %260 = vmatpush2.msra.mxu0 %v89
    %261 = vmatprep.subr.mxu0 0.0
    %262 = vmatpush2.msra.mxu0 %v88
    %263 = vmatprep.subr.mxu0 0.0
    %264 = vmatpush2.msra.mxu0 %v87
    %265 = vmatprep.subr.mxu0 0.0
    %266 = vmatpush2.msra.mxu0 %v86
    %267 = vmatprep.subr.mxu0 0.0
    %268 = vmatpush2.msra.mxu0 %v85
    %269 = vmatprep.subr.mxu0 0.0
    %270 = vmatpush2.msra.mxu0 %v84
    %271 = vmatprep.subr.mxu0 0.0
    %272 = vmatpush2.msra.mxu0 %v83
    %273 = vmatprep.subr.mxu0 0.0
    %274 = vmatpush2.msra.mxu0 %v82
    %275 = vmatprep.subr.mxu0 0.0
    %276 = vmatpush2.msra.mxu0 %v81
    %277 = vmatprep.subr.mxu0 0.0
    %278 = vmatpush2.msra.mxu0 %v80
    %279 = vmatprep.subr.mxu0 0.0
    %280 = vmatpush2.msra.mxu0 %v79
    %281 = vmatprep.subr.mxu0 0.0
    %282 = vmatpush2.msra.mxu0 %v78
    %283 = vmatprep.subr.mxu0 0.0
    %284 = vmatpush2.msra.mxu0 %v77
    %285 = vmatprep.subr.mxu0 0.0
    %286 = vmatpush2.msra.mxu0 %v76
    %287 = vmatprep.subr.mxu0 0.0
    %288 = vmatpush2.msra.mxu0 %v75
    %289 = vmatprep.subr.mxu0 0.0
    %290 = vmatpush2.msra.mxu0 %v74
    %291 = vmatprep.mubr.f32.mxu0 %v216
    %292 = vmatmul.mubr.f32.gmra.mxu0 %v215
    %v293 = vpop.f32.mrf.mxu0
    %v294 = vadd.f32 %v225, %v293
    %v295 = vpop.f32.mrf.mxu0
    %296 = vmatprep.mubr.f32.mxu0 %v218
    %297 = vmatmul.mubr.f32.gmra.mxu0 %v217
    %v298 = vpop.f32.mrf.mxu0
    %v299 = vadd.f32 %v225, %v298
    %v300 = vpop.f32.mrf.mxu0
    %301 = vmatprep.mubr.f32.mxu0 %v220
    %302 = vmatmul.mubr.f32.gmra.mxu0 %v219
    %v303 = vpop.f32.mrf.mxu0
    %v304 = vadd.f32 %v225, %v303
    %v305 = vpop.f32.mrf.mxu0
    %306 = vdwg.mxu0
    %v307 = vmax.f32 %v294, 0.0
    %v308 = vmax.f32 %v299, 0.0
    %v309 = vmax.f32 %v304, 0.0
    %v311 = vlaneseq
    %v312 = vshrl.u32 %v311, 7
    %v313 = vsub.s32 0, %v312
    %v314 = vrot.slane %v107, %v313
    %316 = vmatprep.subr.mxu0 0.0
    %317 = vmatpush1.msra.mxu0 %v106
    %318 = vmatprep.subr.mxu0 0.0
    %319 = vmatpush1.msra.mxu0 %v105
    %320 = vmatprep.subr.mxu0 0.0
    %321 = vmatpush1.msra.mxu0 %v104
    %322 = vmatprep.subr.mxu0 0.0
    %323 = vmatpush1.msra.mxu0 %v103
    %324 = vmatprep.subr.mxu0 0.0
    %325 = vmatpush1.msra.mxu0 %v102
    %326 = vmatprep.subr.mxu0 0.0
    %327 = vmatpush1.msra.mxu0 %v101
    %328 = vmatprep.subr.mxu0 0.0
    %329 = vmatpush1.msra.mxu0 %v100
    %330 = vmatprep.subr.mxu0 0.0
    %331 = vmatpush1.msra.mxu0 %v99
    %332 = vmatprep.subr.mxu0 0.0
    %333 = vmatpush1.msra.mxu0 %v98
    %334 = vmatprep.subr.mxu0 0.0
    %335 = vmatpush1.msra.mxu0 %v97
    %336 = vmatprep.subr.mxu0 0.0
    %337 = vmatpush1.msra.mxu0 %v96
    %338 = vmatprep.subr.mxu0 0.0
    %339 = vmatpush1.msra.mxu0 %v95
    %340 = vmatprep.subr.mxu0 0.0
    %341 = vmatpush1.msra.mxu0 %v94
    %342 = vmatprep.subr.mxu0 0.0
    %343 = vmatpush1.msra.mxu0 %v93
    %344 = vmatprep.subr.mxu0 0.0
    %345 = vmatpush1.msra.mxu0 %v92
    %346 = vmatprep.subr.mxu0 0.0
    %347 = vmatpush1.msra.mxu0 %v91
    %348 = vmatprep.subr.mxu0 0.0
    %349 = vmatpush2.msra.mxu0 0.0
    %350 = vmatprep.subr.mxu0 0.0
    %351 = vmatpush2.msra.mxu0 0.0
    %352 = vmatprep.subr.mxu0 0.0
    %353 = vmatpush2.msra.mxu0 0.0
    %354 = vmatprep.subr.mxu0 0.0
    %355 = vmatpush2.msra.mxu0 0.0
    %356 = vmatprep.subr.mxu0 0.0
    %357 = vmatpush2.msra.mxu0 0.0
    %358 = vmatprep.subr.mxu0 0.0
    %359 = vmatpush2.msra.mxu0 0.0
    %360 = vmatprep.subr.mxu0 0.0
    %361 = vmatpush2.msra.mxu0 0.0
    %362 = vmatprep.subr.mxu0 0.0
    %363 = vmatpush2.msra.mxu0 0.0
    %364 = vmatprep.subr.mxu0 0.0
    %365 = vmatpush2.msra.mxu0 0.0
    %366 = vmatprep.subr.mxu0 0.0
    %367 = vmatpush2.msra.mxu0 0.0
    %368 = vmatprep.subr.mxu0 0.0
    %369 = vmatpush2.msra.mxu0 0.0
    %370 = vmatprep.subr.mxu0 0.0
    %371 = vmatpush2.msra.mxu0 0.0
    %372 = vmatprep.subr.mxu0 0.0
    %373 = vmatpush2.msra.mxu0 0.0
    %374 = vmatprep.subr.mxu0 0.0
    %375 = vmatpush2.msra.mxu0 0.0
    %376 = vmatprep.subr.mxu0 0.0
    %377 = vmatpush2.msra.mxu0 0.0
    %378 = vmatprep.subr.mxu0 0.0
    %379 = vmatpush2.msra.mxu0 0.0
    %380 = vmatprep.mubr.f32.mxu0 0.0
    %381 = vmatmul.mubr.f32.gmra.mxu0 %v307
    %v382 = vpop.f32.mrf.mxu0
    %v383 = vadd.f32 %v314, %v382
    %v384 = vpop.f32.mrf.mxu0
    %385 = vmatprep.mubr.f32.mxu0 0.0
    %386 = vmatmul.mubr.f32.gmra.mxu0 %v308
    %v387 = vpop.f32.mrf.mxu0
    %v388 = vadd.f32 %v314, %v387
    %v389 = vpop.f32.mrf.mxu0
    %390 = vmatprep.mubr.f32.mxu0 0.0
    %391 = vmatmul.mubr.f32.gmra.mxu0 %v309
    %v392 = vpop.f32.mrf.mxu0
    %v393 = vadd.f32 %v314, %v392
    %v394 = vpop.f32.mrf.mxu0
    %395 = vdwg.mxu0
    %vm396 = vcmask 261120
    %397 = vst.msk [vmem:[#allocation5] sm:$0xff] %vm396, %v383
    %398 = vst.msk [vmem:[#allocation5 + $0x8] sm:$0xff] %vm396, %v388
    %399 = vst.msk [vmem:[#allocation5 + $0x10] sm:$0xff] %vm396, %v393
    // Predicated region
    $region34: #{tpu_custom_call.1} parent=1 // pred_check
      _
    $region35: #{tpu_custom_call.1} parent=1 // pred_check_branch
      %401 = sbr.rel (0) target = $region37
    $region36: #{tpu_custom_call.1} parent=1 // pred_region
      %s403 = ssub.s32 384, 384
      %404 = vsyncadd [#allocation4], %s403
      %s405 = sshll.u32 [#allocation5], 4
      %s406 = int_to_ptr.vmem [resolvable:$true] %s405
      %411 = dma.vmem_to_hbm [thread:$0]  %s406, 384, %s7, [#allocation4], 128, 128, 8
    $region37: #{tpu_custom_call.1} parent=1 // pred_fallthru
      _
    // Predicated region
    $region38: #{tpu_custom_call.1} parent=1 // pred_check
      _
    $region39: #{tpu_custom_call.1} parent=1 // pred_check_branch
      %413 = sbr.rel (0) target = $region41
    $region40: #{tpu_custom_call.1} parent=1 // pred_region
      %414 = dma.done [#allocation4], 384
    $region41: #{tpu_custom_call.1} parent=1 // pred_fallthru
      _
    %415 = vsyncpa [#allocation3], 1
    %416 = vsyncpa [#allocation4], 1

</llo_original>
